<compile_context>
chip_gen: v6e
topology: v6e:2x2x1
jax: 0.10.0
libtpu: 0.0.40
codegen_flags: <defaults>
</compile_context>

<pallas_src>
import jax
import jax.numpy as jnp
import numpy as np
from jax.experimental import pallas as pl
from jax.experimental.pallas import tpu as pltpu

# real dims from the module defaults
IN_D = 2
R1D = 10
L2D = 5
R2D = 10
OUT_D = 1

PAD = 128          # lane width of the packed weight planes / output
KPAD = 16          # contraction width (all real in-dims + residual + bias <= 16)
XOFF = R1D         # lanes [10:12] carry x   (residual for cat([r1, x]))
LOFF = R2D         # lanes [10:15] carry l1  (residual for cat([r2, l1]))
BIAS = 15          # lane / weight-row carrying the constant 1.0 (bias trick)


def _mlp_kernel(x_ref, w_ref, o_ref):
    f32 = jnp.float32

    # Build the (1, KPAD) activation vreg from the two SMEM scalars:
    #   lanes [XOFF:XOFF+2] = x, lane BIAS = 1.0, everything else 0.
    lane = jax.lax.broadcasted_iota(jnp.int32, (1, KPAD), 1)
    a0 = jnp.where(lane == XOFF, x_ref[0], 0.0)
    a0 = jnp.where(lane == XOFF + 1, x_ref[1], a0)
    a0 = jnp.where(lane == BIAS, 1.0, a0)

    # r1 = relu(relu_1(x)) in lanes [0:R1D]  (bias folded in row BIAS of plane 0;
    # lanes >= R1D of the matmul output are exactly 0, so the full relu is safe).
    r1 = jnp.maximum(jnp.dot(a0, w_ref[0], preferred_element_type=f32), 0.0)

    # cat([r1, x]): single add of non-overlapping lanes (r1 in [0:10], x in [10:12],
    # constant 1.0 at lane 15).
    c1 = r1[:, :KPAD] + a0

    # l1 = lin_1(cat1): one matmul over the full K=16 contraction; plane 1 emits
    # l1 directly into lanes [LOFF:LOFF+L2D] and re-emits the 1.0 at lane BIAS.
    a1 = jnp.dot(c1, w_ref[1], preferred_element_type=f32)
    a1k = a1[:, :KPAD]

    # r2 = relu(relu_2(l1)) in lanes [0:R2D].
    r2 = jnp.maximum(jnp.dot(a1k, w_ref[2], preferred_element_type=f32), 0.0)

    # cat([r2, l1]): single add of non-overlapping lanes (r2 in [0:10], l1 in [10:15]).
    c2 = r2[:, :KPAD] + a1k

    # out = lin_2(cat2): scalar at lane 0 (bias folded in row BIAS of plane 3).
    o_ref[...] = jnp.dot(c2, w_ref[3], preferred_element_type=f32)


def make_params(key):
    """Deterministic init mimicking torch.nn.Linear default (U[-1/sqrt(fan_in), +])."""
    def lin(k, out_d, in_d):
        kw, kb = jax.random.split(k)
        bound = 1.0 / np.sqrt(in_d)
        w = jax.random.uniform(kw, (out_d, in_d), jnp.float32, -bound, bound)
        b = jax.random.uniform(kb, (out_d,), jnp.float32, -bound, bound)
        return w, b

    k1, k2, k3, k4 = jax.random.split(key, 4)
    relu_1 = lin(k1, R1D, IN_D)            # Linear(2, 10)
    lin_1 = lin(k2, L2D, R1D + IN_D)       # Linear(12, 5)
    relu_2 = lin(k3, R2D, L2D)             # Linear(5, 10)
    lin_2 = lin(k4, OUT_D, R2D + L2D)      # Linear(15, 1)
    return relu_1, lin_1, relu_2, lin_2


def prepare_params(params):
    """One-time host-side pack: 4 weight planes (K=16, N=128), biases folded.

    Activation lane layout (K = 16 lanes):
      [0:R1D]        r1 / r2          (stage outputs)
      [XOFF:XOFF+2]  x residual       (for cat([r1, x]))
      [LOFF:LOFF+5]  l1 residual      (for cat([r2, l1]))
      [BIAS]         constant 1.0

    Plane layout:
      0: relu_1   reads x   from rows [XOFF:XOFF+2], writes r1  to lanes [0:R1D]
      1: lin_1    reads r1  from rows [0:R1D] and x from rows [XOFF:XOFF+2],
                  writes l1 to lanes [LOFF:LOFF+L2D], passes 1.0 through [BIAS,BIAS]
      2: relu_2   reads l1  from rows [LOFF:LOFF+L2D], writes r2 to lanes [0:R2D]
      3: lin_2    reads r2  from rows [0:R2D] and l1 from rows [LOFF:LOFF+L2D],
                  writes the scalar output to lane 0
    """
    (wr1, br1), (w1, b1), (wr2, br2), (w2, b2) = [
        (np.asarray(w, np.float32), np.asarray(b, np.float32)) for (w, b) in params
    ]
    W = np.zeros((4, KPAD, PAD), np.float32)

    # Plane 0: relu_1
    W[0, XOFF:XOFF + IN_D, :R1D] = wr1.T
    W[0, BIAS, :R1D] = br1

    # Plane 1: lin_1 over the full concat, emitted into the residual lanes.
    W[1, :R1D, LOFF:LOFF + L2D] = w1[:, :R1D].T
    W[1, XOFF:XOFF + IN_D, LOFF:LOFF + L2D] = w1[:, R1D:].T
    W[1, BIAS, LOFF:LOFF + L2D] = b1
    W[1, BIAS, BIAS] = 1.0          # carry the constant-1 lane forward

    # Plane 2: relu_2
    W[2, LOFF:LOFF + L2D, :R2D] = wr2.T
    W[2, BIAS, :R2D] = br2

    # Plane 3: lin_2 over the full concat.
    W[3, :R2D, :OUT_D] = w2[:, :R2D].T
    W[3, LOFF:LOFF + L2D, :OUT_D] = w2[:, R2D:].T
    W[3, BIAS, :OUT_D] = b2

    return jnp.asarray(W)


@jax.jit
def forward_pallas(x, w_packed):
    """x: (2,) float32, w_packed: (4, 16, 128) from prepare_params."""
    out_pad = pl.pallas_call(
        _mlp_kernel,
        out_shape=jax.ShapeDtypeStruct((1, PAD), jnp.float32),
        grid=(),
        in_specs=[
            pl.BlockSpec(memory_space=pltpu.MemorySpace.SMEM),      # x scalars
            pl.BlockSpec((4, KPAD, PAD), lambda: (0, 0, 0)),        # packed weights
        ],
        out_specs=pl.BlockSpec((1, PAD), lambda: (0, 0)),
    )(x, w_packed)

    # l2_out has shape (1,) in the torch module
    return out_pad[0, :OUT_D]


def forward_ref(x, params):
    """Pure-JAX reference mirroring the torch forward exactly."""
    (wr1, br1), (w1, b1), (wr2, br2), (w2, b2) = params
    x = jnp.asarray(x, jnp.float32)
    r1 = jnp.maximum(x @ wr1.T + br1, 0.0)
    l1 = jnp.concatenate([r1, x], 0) @ w1.T + b1
    r2 = jnp.maximum(l1 @ wr2.T + br2, 0.0)
    l2 = jnp.concatenate([r2, l1], 0) @ w2.T + b2
    return l2


if __name__ == "__main__":
    key = jax.random.PRNGKey(0)
    kp, kx = jax.random.split(key)
    params = make_params(kp)
    w_packed = prepare_params(params)                 # one-time host-side pack
    x = jax.random.normal(kx, (IN_D,), jnp.float32)   # 1-D input of 2 features

    out = forward_pallas(x, w_packed)
    out = jax.block_until_ready(out)

    ref = forward_ref(x, params)
    np.testing.assert_allclose(np.asarray(out), np.asarray(ref), rtol=1e-5, atol=1e-5)

    print("KERNEL_OK")
</pallas_src>

<mosaic_0001>
module attributes {stable_mosaic.version = 11 : i64} {
  func.func @_mlp_kernel(%arg0: memref<2xf32, #tpu.memory_space<smem>>, %arg1: memref<4x16x128xf32, #tpu.memory_space<vmem>>, %arg2: memref<1x128xf32, #tpu.memory_space<vmem>>) attributes {dimension_semantics = [], scalar_prefetch = 0 : i64, scratch_operands = 0 : i64, tpu.core_type = #tpu.core_type<tc>} {
    %0 = tpu.iota {dimensions = array<i32: 1>} : vector<1x16xi32>
    %c10_i32 = arith.constant 10 : i32
    %1 = vector.broadcast %c10_i32 : i32 to vector<1x16xi32>
    %2 = arith.cmpi eq, %0, %1 : vector<1x16xi32>
    %c0 = arith.constant 0 : index
    %3 = memref.load %arg0[%c0] : memref<2xf32, #tpu.memory_space<smem>>
    %cst = arith.constant 0.000000e+00 : f32
    %4 = vector.broadcast %3 : f32 to vector<1x16xf32>
    %5 = vector.broadcast %cst : f32 to vector<1x16xf32>
    %6 = arith.select %2, %4, %5 : vector<1x16xi1>, vector<1x16xf32>
    %c11_i32 = arith.constant 11 : i32
    %7 = vector.broadcast %c11_i32 : i32 to vector<1x16xi32>
    %8 = arith.cmpi eq, %0, %7 : vector<1x16xi32>
    %c1 = arith.constant 1 : index
    %9 = memref.load %arg0[%c1] : memref<2xf32, #tpu.memory_space<smem>>
    %10 = vector.broadcast %9 : f32 to vector<1x16xf32>
    %11 = arith.select %8, %10, %6 : vector<1x16xi1>, vector<1x16xf32>
    %c15_i32 = arith.constant 15 : i32
    %12 = vector.broadcast %c15_i32 : i32 to vector<1x16xi32>
    %13 = arith.cmpi eq, %0, %12 : vector<1x16xi32>
    %cst_0 = arith.constant 1.000000e+00 : f32
    %14 = vector.broadcast %cst_0 : f32 to vector<1x16xf32>
    %15 = arith.select %13, %14, %11 : vector<1x16xi1>, vector<1x16xf32>
    %c0_1 = arith.constant 0 : index
    %c0_2 = arith.constant 0 : index
    %c0_3 = arith.constant 0 : index
    %16 = vector.load %arg1[%c0_1, %c0_2, %c0_3] : memref<4x16x128xf32, #tpu.memory_space<vmem>>, vector<1x16x128xf32>
    %17 = vector.shape_cast %16 : vector<1x16x128xf32> to vector<16x128xf32>
    %cst_4 = arith.constant dense<0.000000e+00> : vector<1x128xf32>
    %18 = tpu.matmul %15, %17, %cst_4 {dimension_numbers = #tpu.dot_dimension_numbers<[1], [0], [0], [1], [0, 0, 1, 1], [], []>} : vector<1x16xf32>, vector<16x128xf32>, vector<1x128xf32> -> vector<1x128xf32>
    %cst_5 = arith.constant 0.000000e+00 : f32
    %19 = vector.broadcast %cst_5 : f32 to vector<1x128xf32>
    %20 = arith.maximumf %18, %19 : vector<1x128xf32>
    %21 = vector.extract_strided_slice %20 {offsets = [0, 0], sizes = [1, 16], strides = [1, 1]} : vector<1x128xf32> to vector<1x16xf32>
    %22 = arith.addf %21, %15 : vector<1x16xf32>
    %c1_6 = arith.constant 1 : index
    %c0_7 = arith.constant 0 : index
    %c0_8 = arith.constant 0 : index
    %23 = vector.load %arg1[%c1_6, %c0_7, %c0_8] : memref<4x16x128xf32, #tpu.memory_space<vmem>>, vector<1x16x128xf32>
    %24 = vector.shape_cast %23 : vector<1x16x128xf32> to vector<16x128xf32>
    %cst_9 = arith.constant dense<0.000000e+00> : vector<1x128xf32>
    %25 = tpu.matmul %22, %24, %cst_9 {dimension_numbers = #tpu.dot_dimension_numbers<[1], [0], [0], [1], [0, 0, 1, 1], [], []>} : vector<1x16xf32>, vector<16x128xf32>, vector<1x128xf32> -> vector<1x128xf32>
    %26 = vector.extract_strided_slice %25 {offsets = [0, 0], sizes = [1, 16], strides = [1, 1]} : vector<1x128xf32> to vector<1x16xf32>
    %c2 = arith.constant 2 : index
    %c0_10 = arith.constant 0 : index
    %c0_11 = arith.constant 0 : index
    %27 = vector.load %arg1[%c2, %c0_10, %c0_11] : memref<4x16x128xf32, #tpu.memory_space<vmem>>, vector<1x16x128xf32>
    %28 = vector.shape_cast %27 : vector<1x16x128xf32> to vector<16x128xf32>
    %cst_12 = arith.constant dense<0.000000e+00> : vector<1x128xf32>
    %29 = tpu.matmul %26, %28, %cst_12 {dimension_numbers = #tpu.dot_dimension_numbers<[1], [0], [0], [1], [0, 0, 1, 1], [], []>} : vector<1x16xf32>, vector<16x128xf32>, vector<1x128xf32> -> vector<1x128xf32>
    %cst_13 = arith.constant 0.000000e+00 : f32
    %30 = vector.broadcast %cst_13 : f32 to vector<1x128xf32>
    %31 = arith.maximumf %29, %30 : vector<1x128xf32>
    %32 = vector.extract_strided_slice %31 {offsets = [0, 0], sizes = [1, 16], strides = [1, 1]} : vector<1x128xf32> to vector<1x16xf32>
    %33 = arith.addf %32, %26 : vector<1x16xf32>
    %c3 = arith.constant 3 : index
    %c0_14 = arith.constant 0 : index
    %c0_15 = arith.constant 0 : index
    %34 = vector.load %arg1[%c3, %c0_14, %c0_15] : memref<4x16x128xf32, #tpu.memory_space<vmem>>, vector<1x16x128xf32>
    %35 = vector.shape_cast %34 : vector<1x16x128xf32> to vector<16x128xf32>
    %cst_16 = arith.constant dense<0.000000e+00> : vector<1x128xf32>
    %36 = tpu.matmul %33, %35, %cst_16 {dimension_numbers = #tpu.dot_dimension_numbers<[1], [0], [0], [1], [0, 0, 1, 1], [], []>} : vector<1x16xf32>, vector<16x128xf32>, vector<1x128xf32> -> vector<1x128xf32>
    %c0_17 = arith.constant 0 : index
    %c0_18 = arith.constant 0 : index
    %37 = vector.load %arg2[%c0_17, %c0_18] : memref<1x128xf32, #tpu.memory_space<vmem>>, vector<1x128xf32>
    tpu.vector_store %arg2[%c0_17, %c0_18], %36 {strides = array<i32>} : memref<1x128xf32, #tpu.memory_space<vmem>>, vector<1x128xf32>,
    return
  }
}

</mosaic_0001>

<llo_original>
// kernel: forward_pallas.1
$region0: #{forward_pallas.1}
  #allocation0 [shape = 'u32[]', space=smem, size = 0x4, offset = 0x4, fixed_abs, tag = 'smem constant byte address 0x4 - core index']
  #allocation1 [shape = 'u32[144,128]{1,0:T(1,128)}', space=vmem, size = 0x12000, scoped, tag = 'internal scratch']
  %s0 = inlined_call_operand.hbm [shape: f32[2], index: 0, kind: input, shape index: {}]
  %s1 = inlined_call_operand.hbm [shape: f32[4,16,128], index: 1, kind: input, shape index: {}]
  %s2 = inlined_call_operand.hbm [shape: f32[1,128], index: 2, kind: output, shape index: {}]
  %s3 = sld [smem:[#allocation0]]
  $region26: #{forward_pallas.1} parent=0
    _
  %s5 = ssub.s32 1, %s3
  %s6 = scalar_select 0, %s5, %s3
  $region1: #{forward_pallas.1} parent=0
    #allocation2 [shape = 'u8[512]{0}', space=smem, size = 0x200, scoped, tag = 'input window, operand 0, single buffered']
    #allocation3 [shape = 's32[1]{0}', space=sflag, size = 0x4, scoped, tag = 'scoped memory for forward_pallas.1']
    #allocation4 [shape = 's32[1]{0}', space=sflag, size = 0x4, scoped, tag = 'scoped memory for forward_pallas.1']
    #allocation5 [shape = 's32[1]{0}', space=sflag, size = 0x4, scoped, tag = 'scoped memory for forward_pallas.1']
    #allocation6 [shape = 'u8[32768]{0}', space=vmem, size = 0x8000, scoped, tag = 'input window, operand 1, single buffered']
    #allocation7 [shape = 'u8[512]{0}', space=vmem, size = 0x400, scoped, tag = 'output window, operand 0, single buffered']
    %7 = vsyncpa [#allocation5], 0
    %8 = vsyncpa [#allocation3], 0
    %9 = vsyncpa [#allocation4], 0
    // Predicated region
    $region2: #{forward_pallas.1} parent=1 // pred_check
      _
    $region3: #{forward_pallas.1} parent=1 // pred_check_branch
      %11 = sbr.rel (0) target = $region5
    $region4: #{forward_pallas.1} parent=1 // pred_region
      %s13 = ssub.s32 16, 16
      %14 = vsyncadd [#allocation5], %s13
      %17 = dma.hbm_to_smem %s0, 16, [#allocation2], [#allocation5]
    $region5: #{forward_pallas.1} parent=1 // pred_fallthru
      _
    // Predicated region
    $region6: #{forward_pallas.1} parent=1 // pred_check
      _
    $region7: #{forward_pallas.1} parent=1 // pred_check_branch
      %19 = sbr.rel (0) target = $region9
    $region8: #{forward_pallas.1} parent=1 // pred_region
      %s21 = ssub.s32 1024, 1024
      %22 = vsyncadd [#allocation3], %s21
      %s23 = sshll.u32 [#allocation6], 4
      %s24 = int_to_ptr.vmem [resolvable:$true] %s23
      %29 = dma.hbm_to_vmem [thread:$0]  %s1, 1024, %s24, [#allocation3], 128, 128, 8
    $region9: #{forward_pallas.1} parent=1 // pred_fallthru
      _
    // Predicated region
    $region10: #{forward_pallas.1} parent=1 // pred_check
      _
    $region11: #{forward_pallas.1} parent=1 // pred_check_branch
      %31 = sbr.rel (0) target = $region13
    $region12: #{forward_pallas.1} parent=1 // pred_region
      %32 = dma.done [#allocation5], 16
    $region13: #{forward_pallas.1} parent=1 // pred_fallthru
      _
    // Predicated region
    $region14: #{forward_pallas.1} parent=1 // pred_check
      _
    $region15: #{forward_pallas.1} parent=1 // pred_check_branch
      %34 = sbr.rel (0) target = $region17
    $region16: #{forward_pallas.1} parent=1 // pred_region
      %35 = dma.done [#allocation3], 1024
    $region17: #{forward_pallas.1} parent=1 // pred_fallthru
      _
    %36 = sfence
    %v37 = vlaneseq
    %v38 = vand.u32 %v37, 127
    %vm39 = vcmp.eq.s32.totalorder %v38, 10
    %s40 = sld [smem:[#allocation2]]
    %v41 = vstv %s40
    %v42 = vsel %vm39, %v41, 0.0
    %vm43 = vcmp.eq.s32.totalorder %v38, 11
    %s44 = sld [smem:[#allocation2 + $0x1]]
    %v45 = vstv %s44
    %v46 = vsel %vm43, %v45, %v42
    %vm47 = vcmp.eq.s32.totalorder %v38, 15
    %v48 = vsel %vm47, 1.0, %v46
    %v49 = vld [vmem:[#allocation6] sm:$0xff]
    %v50 = vld [vmem:[#allocation6 + $0x8] sm:$0xff]
    %vm51 = vcmask 130048
    %v53 = vsel %vm51, %v48, 0
    %55 = vmatprep.subr.mxu0 0.0
    %56 = vmatpush1.msra.mxu0 0.0
    %57 = vmatprep.subr.mxu0 0.0
    %58 = vmatpush1.msra.mxu0 0.0
    %59 = vmatprep.subr.mxu0 0.0
    %60 = vmatpush1.msra.mxu0 0.0
    %61 = vmatprep.subr.mxu0 0.0
    %62 = vmatpush1.msra.mxu0 0.0
    %63 = vmatprep.subr.mxu0 0.0
    %64 = vmatpush1.msra.mxu0 0.0
    %65 = vmatprep.subr.mxu0 0.0
    %66 = vmatpush1.msra.mxu0 0.0
    %67 = vmatprep.subr.mxu0 0.0
    %68 = vmatpush1.msra.mxu0 0.0
    %69 = vmatprep.subr.mxu0 0.0
    %70 = vmatpush1.msra.mxu0 0.0
    %71 = vmatprep.subr.mxu0 0.0
    %72 = vmatpush1.msra.mxu0 0.0
    %73 = vmatprep.subr.mxu0 0.0
    %74 = vmatpush1.msra.mxu0 0.0
    %75 = vmatprep.subr.mxu0 0.0
    %76 = vmatpush1.msra.mxu0 0.0
    %77 = vmatprep.subr.mxu0 0.0
    %78 = vmatpush1.msra.mxu0 0.0
    %79 = vmatprep.subr.mxu0 0.0
    %80 = vmatpush1.msra.mxu0 0.0
    %81 = vmatprep.subr.mxu0 0.0
    %82 = vmatpush1.msra.mxu0 0.0
    %83 = vmatprep.subr.mxu0 0.0
    %84 = vmatpush1.msra.mxu0 %v50
    %85 = vmatprep.subr.mxu0 0.0
    %86 = vmatpush1.msra.mxu0 %v49
    %87 = vmatprep.subr.mxu0 0.0
    %88 = vmatpush2.msra.mxu0 0.0
    %89 = vmatprep.subr.mxu0 0.0
    %90 = vmatpush2.msra.mxu0 0.0
    %91 = vmatprep.subr.mxu0 0.0
    %92 = vmatpush2.msra.mxu0 0.0
    %93 = vmatprep.subr.mxu0 0.0
    %94 = vmatpush2.msra.mxu0 0.0
    %95 = vmatprep.subr.mxu0 0.0
    %96 = vmatpush2.msra.mxu0 0.0
    %97 = vmatprep.subr.mxu0 0.0
    %98 = vmatpush2.msra.mxu0 0.0
    %99 = vmatprep.subr.mxu0 0.0
    %100 = vmatpush2.msra.mxu0 0.0
    %101 = vmatprep.subr.mxu0 0.0
    %102 = vmatpush2.msra.mxu0 0.0
    %103 = vmatprep.subr.mxu0 0.0
    %104 = vmatpush2.msra.mxu0 0.0
    %105 = vmatprep.subr.mxu0 0.0
    %106 = vmatpush2.msra.mxu0 0.0
    %107 = vmatprep.subr.mxu0 0.0
    %108 = vmatpush2.msra.mxu0 0.0
    %109 = vmatprep.subr.mxu0 0.0
    %110 = vmatpush2.msra.mxu0 0.0
    %111 = vmatprep.subr.mxu0 0.0
    %112 = vmatpush2.msra.mxu0 0.0
    %113 = vmatprep.subr.mxu0 0.0
    %114 = vmatpush2.msra.mxu0 0.0
    %115 = vmatprep.subr.mxu0 0.0
    %116 = vmatpush2.msra.mxu0 0.0
    %117 = vmatprep.subr.mxu0 0.0
    %118 = vmatpush2.msra.mxu0 0.0
    %119 = vmatprep.mubr.f32.mxu0 0.0
    %120 = vmatmul.mubr.f32.gmra.mxu0 %v53
    %v121 = vpop.f32.mrf.mxu0
    %v122 = vadd.f32 0.0, %v121
    %v123 = vpop.f32.mrf.mxu0
    %124 = vdwg.mxu0
    %v125 = vmax.f32 %v122, 0.0
    %v126 = vadd.f32 %v125, %v48
    %s127 = scalar_lea.vmem [#allocation6], 16
    %v128 = vld [vmem:[%s127] sm:$0xff]
    %v129 = vld [vmem:[%s127 + $0x8] sm:$0xff]
    %v131 = vsel %vm51, %v126, 0
    %133 = vmatprep.subr.mxu0 0.0
    %134 = vmatpush1.msra.mxu0 0.0
    %135 = vmatprep.subr.mxu0 0.0
    %136 = vmatpush1.msra.mxu0 0.0
    %137 = vmatprep.subr.mxu0 0.0
    %138 = vmatpush1.msra.mxu0 0.0
    %139 = vmatprep.subr.mxu0 0.0
    %140 = vmatpush1.msra.mxu0 0.0
    %141 = vmatprep.subr.mxu0 0.0
    %142 = vmatpush1.msra.mxu0 0.0
    %143 = vmatprep.subr.mxu0 0.0
    %144 = vmatpush1.msra.mxu0 0.0
    %145 = vmatprep.subr.mxu0 0.0
    %146 = vmatpush1.msra.mxu0 0.0
    %147 = vmatprep.subr.mxu0 0.0
    %148 = vmatpush1.msra.mxu0 0.0
    %149 = vmatprep.subr.mxu0 0.0
    %150 = vmatpush1.msra.mxu0 0.0
    %151 = vmatprep.subr.mxu0 0.0
    %152 = vmatpush1.msra.mxu0 0.0
    %153 = vmatprep.subr.mxu0 0.0
    %154 = vmatpush1.msra.mxu0 0.0
    %155 = vmatprep.subr.mxu0 0.0
    %156 = vmatpush1.msra.mxu0 0.0
    %157 = vmatprep.subr.mxu0 0.0
    %158 = vmatpush1.msra.mxu0 0.0
    %159 = vmatprep.subr.mxu0 0.0
    %160 = vmatpush1.msra.mxu0 0.0
    %161 = vmatprep.subr.mxu0 0.0
    %162 = vmatpush1.msra.mxu0 %v129
    %163 = vmatprep.subr.mxu0 0.0
    %164 = vmatpush1.msra.mxu0 %v128
    %165 = vmatprep.subr.mxu0 0.0
    %166 = vmatpush2.msra.mxu0 0.0
    %167 = vmatprep.subr.mxu0 0.0
    %168 = vmatpush2.msra.mxu0 0.0
    %169 = vmatprep.subr.mxu0 0.0
    %170 = vmatpush2.msra.mxu0 0.0
    %171 = vmatprep.subr.mxu0 0.0
    %172 = vmatpush2.msra.mxu0 0.0
    %173 = vmatprep.subr.mxu0 0.0
    %174 = vmatpush2.msra.mxu0 0.0
    %175 = vmatprep.subr.mxu0 0.0
    %176 = vmatpush2.msra.mxu0 0.0
    %177 = vmatprep.subr.mxu0 0.0
    %178 = vmatpush2.msra.mxu0 0.0
    %179 = vmatprep.subr.mxu0 0.0
    %180 = vmatpush2.msra.mxu0 0.0
    %181 = vmatprep.subr.mxu0 0.0
    %182 = vmatpush2.msra.mxu0 0.0
    %183 = vmatprep.subr.mxu0 0.0
    %184 = vmatpush2.msra.mxu0 0.0
    %185 = vmatprep.subr.mxu0 0.0
    %186 = vmatpush2.msra.mxu0 0.0
    %187 = vmatprep.subr.mxu0 0.0
    %188 = vmatpush2.msra.mxu0 0.0
    %189 = vmatprep.subr.mxu0 0.0
    %190 = vmatpush2.msra.mxu0 0.0
    %191 = vmatprep.subr.mxu0 0.0
    %192 = vmatpush2.msra.mxu0 0.0
    %193 = vmatprep.subr.mxu0 0.0
    %194 = vmatpush2.msra.mxu0 0.0
    %195 = vmatprep.subr.mxu0 0.0
    %196 = vmatpush2.msra.mxu0 0.0
    %197 = vmatprep.mubr.f32.mxu0 0.0
    %198 = vmatmul.mubr.f32.gmra.mxu0 %v131
    %v199 = vpop.f32.mrf.mxu0
    %v200 = vadd.f32 0.0, %v199
    %v201 = vpop.f32.mrf.mxu0
    %202 = vdwg.mxu0
    %s203 = scalar_lea.vmem [#allocation6], 32
    %v204 = vld [vmem:[%s203] sm:$0xff]
    %v205 = vld [vmem:[%s203 + $0x8] sm:$0xff]
    %v207 = vsel %vm51, %v200, 0
    %209 = vmatprep.subr.mxu0 0.0
    %210 = vmatpush1.msra.mxu0 0.0
    %211 = vmatprep.subr.mxu0 0.0
    %212 = vmatpush1.msra.mxu0 0.0
    %213 = vmatprep.subr.mxu0 0.0
    %214 = vmatpush1.msra.mxu0 0.0
    %215 = vmatprep.subr.mxu0 0.0
    %216 = vmatpush1.msra.mxu0 0.0
    %217 = vmatprep.subr.mxu0 0.0
    %218 = vmatpush1.msra.mxu0 0.0
    %219 = vmatprep.subr.mxu0 0.0
    %220 = vmatpush1.msra.mxu0 0.0
    %221 = vmatprep.subr.mxu0 0.0
    %222 = vmatpush1.msra.mxu0 0.0
    %223 = vmatprep.subr.mxu0 0.0
    %224 = vmatpush1.msra.mxu0 0.0
    %225 = vmatprep.subr.mxu0 0.0
    %226 = vmatpush1.msra.mxu0 0.0
    %227 = vmatprep.subr.mxu0 0.0
    %228 = vmatpush1.msra.mxu0 0.0
    %229 = vmatprep.subr.mxu0 0.0
    %230 = vmatpush1.msra.mxu0 0.0
    %231 = vmatprep.subr.mxu0 0.0
    %232 = vmatpush1.msra.mxu0 0.0
    %233 = vmatprep.subr.mxu0 0.0
    %234 = vmatpush1.msra.mxu0 0.0
    %235 = vmatprep.subr.mxu0 0.0
    %236 = vmatpush1.msra.mxu0 0.0
    %237 = vmatprep.subr.mxu0 0.0
    %238 = vmatpush1.msra.mxu0 %v205
    %239 = vmatprep.subr.mxu0 0.0
    %240 = vmatpush1.msra.mxu0 %v204
    %241 = vmatprep.subr.mxu0 0.0
    %242 = vmatpush2.msra.mxu0 0.0
    %243 = vmatprep.subr.mxu0 0.0
    %244 = vmatpush2.msra.mxu0 0.0
    %245 = vmatprep.subr.mxu0 0.0
    %246 = vmatpush2.msra.mxu0 0.0
    %247 = vmatprep.subr.mxu0 0.0
    %248 = vmatpush2.msra.mxu0 0.0
    %249 = vmatprep.subr.mxu0 0.0
    %250 = vmatpush2.msra.mxu0 0.0
    %251 = vmatprep.subr.mxu0 0.0
    %252 = vmatpush2.msra.mxu0 0.0
    %253 = vmatprep.subr.mxu0 0.0
    %254 = vmatpush2.msra.mxu0 0.0
    %255 = vmatprep.subr.mxu0 0.0
    %256 = vmatpush2.msra.mxu0 0.0
    %257 = vmatprep.subr.mxu0 0.0
    %258 = vmatpush2.msra.mxu0 0.0
    %259 = vmatprep.subr.mxu0 0.0
    %260 = vmatpush2.msra.mxu0 0.0
    %261 = vmatprep.subr.mxu0 0.0
    %262 = vmatpush2.msra.mxu0 0.0
    %263 = vmatprep.subr.mxu0 0.0
    %264 = vmatpush2.msra.mxu0 0.0
    %265 = vmatprep.subr.mxu0 0.0
    %266 = vmatpush2.msra.mxu0 0.0
    %267 = vmatprep.subr.mxu0 0.0
    %268 = vmatpush2.msra.mxu0 0.0
    %269 = vmatprep.subr.mxu0 0.0
    %270 = vmatpush2.msra.mxu0 0.0
    %271 = vmatprep.subr.mxu0 0.0
    %272 = vmatpush2.msra.mxu0 0.0
    %273 = vmatprep.mubr.f32.mxu0 0.0
    %274 = vmatmul.mubr.f32.gmra.mxu0 %v207
    %v275 = vpop.f32.mrf.mxu0
    %v276 = vadd.f32 0.0, %v275
    %v277 = vpop.f32.mrf.mxu0
    %278 = vdwg.mxu0
    %v279 = vmax.f32 %v276, 0.0
    %v280 = vadd.f32 %v279, %v200
    %s281 = scalar_lea.vmem [#allocation6], 48
    %v282 = vld [vmem:[%s281] sm:$0xff]
    %v283 = vld [vmem:[%s281 + $0x8] sm:$0xff]
    %v285 = vsel %vm51, %v280, 0
    %287 = vmatprep.subr.mxu0 0.0
    %288 = vmatpush1.msra.mxu0 0.0
    %289 = vmatprep.subr.mxu0 0.0
    %290 = vmatpush1.msra.mxu0 0.0
    %291 = vmatprep.subr.mxu0 0.0
    %292 = vmatpush1.msra.mxu0 0.0
    %293 = vmatprep.subr.mxu0 0.0
    %294 = vmatpush1.msra.mxu0 0.0
    %295 = vmatprep.subr.mxu0 0.0
    %296 = vmatpush1.msra.mxu0 0.0
    %297 = vmatprep.subr.mxu0 0.0
    %298 = vmatpush1.msra.mxu0 0.0
    %299 = vmatprep.subr.mxu0 0.0
    %300 = vmatpush1.msra.mxu0 0.0
    %301 = vmatprep.subr.mxu0 0.0
    %302 = vmatpush1.msra.mxu0 0.0
    %303 = vmatprep.subr.mxu0 0.0
    %304 = vmatpush1.msra.mxu0 0.0
    %305 = vmatprep.subr.mxu0 0.0
    %306 = vmatpush1.msra.mxu0 0.0
    %307 = vmatprep.subr.mxu0 0.0
    %308 = vmatpush1.msra.mxu0 0.0
    %309 = vmatprep.subr.mxu0 0.0
    %310 = vmatpush1.msra.mxu0 0.0
    %311 = vmatprep.subr.mxu0 0.0
    %312 = vmatpush1.msra.mxu0 0.0
    %313 = vmatprep.subr.mxu0 0.0
    %314 = vmatpush1.msra.mxu0 0.0
    %315 = vmatprep.subr.mxu0 0.0
    %316 = vmatpush1.msra.mxu0 %v283
    %317 = vmatprep.subr.mxu0 0.0
    %318 = vmatpush1.msra.mxu0 %v282
    %319 = vmatprep.subr.mxu0 0.0
    %320 = vmatpush2.msra.mxu0 0.0
    %321 = vmatprep.subr.mxu0 0.0
    %322 = vmatpush2.msra.mxu0 0.0
    %323 = vmatprep.subr.mxu0 0.0
    %324 = vmatpush2.msra.mxu0 0.0
    %325 = vmatprep.subr.mxu0 0.0
    %326 = vmatpush2.msra.mxu0 0.0
    %327 = vmatprep.subr.mxu0 0.0
    %328 = vmatpush2.msra.mxu0 0.0
    %329 = vmatprep.subr.mxu0 0.0
    %330 = vmatpush2.msra.mxu0 0.0
    %331 = vmatprep.subr.mxu0 0.0
    %332 = vmatpush2.msra.mxu0 0.0
    %333 = vmatprep.subr.mxu0 0.0
    %334 = vmatpush2.msra.mxu0 0.0
    %335 = vmatprep.subr.mxu0 0.0
    %336 = vmatpush2.msra.mxu0 0.0
    %337 = vmatprep.subr.mxu0 0.0
    %338 = vmatpush2.msra.mxu0 0.0
    %339 = vmatprep.subr.mxu0 0.0
    %340 = vmatpush2.msra.mxu0 0.0
    %341 = vmatprep.subr.mxu0 0.0
    %342 = vmatpush2.msra.mxu0 0.0
    %343 = vmatprep.subr.mxu0 0.0
    %344 = vmatpush2.msra.mxu0 0.0
    %345 = vmatprep.subr.mxu0 0.0
    %346 = vmatpush2.msra.mxu0 0.0
    %347 = vmatprep.subr.mxu0 0.0
    %348 = vmatpush2.msra.mxu0 0.0
    %349 = vmatprep.subr.mxu0 0.0
    %350 = vmatpush2.msra.mxu0 0.0
    %351 = vmatprep.mubr.f32.mxu0 0.0
    %352 = vmatmul.mubr.f32.gmra.mxu0 %v285
    %v353 = vpop.f32.mrf.mxu0
    %v354 = vadd.f32 0.0, %v353
    %v355 = vpop.f32.mrf.mxu0
    %356 = vdwg.mxu0
    %357 = vst [vmem:[#allocation7] sm:$0x1] %v354
    // Predicated region
    $region18: #{forward_pallas.1} parent=1 // pred_check
      _
    $region19: #{forward_pallas.1} parent=1 // pred_check_branch
      %359 = sbr.rel (0) target = $region21
    $region20: #{forward_pallas.1} parent=1 // pred_region
      %s361 = ssub.s32 16, 16
      %362 = vsyncadd [#allocation4], %s361
      %s364 = sshll.u32 [#allocation7], 4
      %s365 = int_to_ptr.vmem [resolvable:$true] %s364
      %367 = dma.vmem_to_hbm [thread:$0]  %s365, 16, %s2, [#allocation4]
    $region21: #{forward_pallas.1} parent=1 // pred_fallthru
      _
    // Predicated region
    $region22: #{forward_pallas.1} parent=1 // pred_check
      _
    $region23: #{forward_pallas.1} parent=1 // pred_check_branch
      %369 = sbr.rel (0) target = $region25
    $region24: #{forward_pallas.1} parent=1 // pred_region
      %370 = dma.done [#allocation4], 16
    $region25: #{forward_pallas.1} parent=1 // pred_fallthru
      _
    %371 = vsyncpa [#allocation3], 1
    %372 = vsyncpa [#allocation4], 1
    %373 = vsyncpa [#allocation5], 1

</llo_original>
